<compile_context>
chip_gen: v6e
topology: v6e:2x2x1
jax: 0.10.0
libtpu: 0.0.40
codegen_flags: <defaults>
</compile_context>

<pallas_src>
import functools

import jax
import jax.numpy as jnp
from jax.experimental import pallas as pl
from jax.experimental.pallas import tpu as pltpu

_LANES = 128
_SUBLANES = 8
_VMEM_LIMIT_BYTES = 32 << 20   # explicit: v5e's default scoped VMEM is only 16 MiB
_INPUT_VMEM_BUDGET = 16 << 20  # budget for the double-buffered packed input


def _cdiv(a, b):
    return (a + b - 1) // b


def _round_up(a, b):
    return _cdiv(a, b) * b


def _default_num_parallel():
    # v5e / v6e expose a single TensorCore per device, so a size-2 "parallel"
    # grid axis only adds padding and a second accumulator.  v7x-class chips
    # have 2 TCs behind one device and benefit from the split.
    try:
        kind = jax.devices()[0].device_kind.lower()
    except Exception:  # pragma: no cover - be safe on exotic backends
        return 1
    return 2 if "7" in kind else 1


def _cwce_partial_kernel(xl_ref, o_ref, *, batch, row_tile, tiles_per_core):
    """Accumulates lane-preserving partial sums for one lane-dense batch tile.

    xl_ref: (2, row_tile, 128) io_dtype -- [0] = logits column 0, [1] = labels.
    o_ref : (1, 3, 8, 128) f32 resident accumulator block (one per core):
              0: num_pos partials
              1: sum(labels * log sigma(x)) partials
              2: sum((1-labels) * log(1 - sigma(x))) partials
    """
    p = pl.program_id(0)   # "parallel" (core) axis
    t = pl.program_id(1)   # "arbitrary" reduction axis over batch tiles

    @pl.when(t == 0)
    def _():
        o_ref[...] = jnp.zeros_like(o_ref)

    x = xl_ref[0].astype(jnp.float32)
    lab = xl_ref[1].astype(jnp.float32)

    # Stable fused log-sigmoid: exactly one exp + one log per element (EUP),
    # shared between the positive and negative branches; log argument is in
    # (1, 2], so no -inf / 0*(-inf) hazards on saturated logits.
    softplus = jnp.log(1.0 + jnp.exp(-jnp.abs(x)))
    log_sig_pos = jnp.minimum(x, 0.0) - softplus     # log sigma(x)
    log_sig_neg = jnp.minimum(-x, 0.0) - softplus    # log(1 - sigma(x))

    def lane_sum(v):
        # (row_tile,128) -> (row_tile/8, 8, 128) -> (8,128): pure VALU vreg
        # adds, no cross-lane XLU reduction.  The final cross-lane reduce of
        # the tiny (8,128) partials happens once in the wrapper.
        return v.reshape(-1, _SUBLANES, _LANES).sum(axis=0)

    def accumulate(lab_v, neg_lab_v):
        o_ref[0, 0] += lane_sum(lab_v)
        o_ref[0, 1] += lane_sum(lab_v * log_sig_pos)
        o_ref[0, 2] += lane_sum(neg_lab_v * log_sig_neg)

    tile_elems = row_tile * _LANES
    tile_start = (p * tiles_per_core + t) * tile_elems

    # Full tiles skip the validity mask entirely; only the tile containing the
    # batch boundary (and any all-padding tiles from the parallel-axis
    # round-up) pay for the iotas + compare + extra multiplies.  The mask is
    # required there: zero-padded x would otherwise add log(0.5) to channel 2.
    @pl.when(tile_start + tile_elems <= batch)
    def _():
        accumulate(lab, 1.0 - lab)

    @pl.when(tile_start + tile_elems > batch)
    def _():
        row_idx = jax.lax.broadcasted_iota(jnp.int32, x.shape, 0)
        lane_idx = jax.lax.broadcasted_iota(jnp.int32, x.shape, 1)
        valid = (tile_start + row_idx * _LANES + lane_idx) < batch
        valid = valid.astype(jnp.float32)
        accumulate(lab * valid, (1.0 - lab) * valid)


@functools.partial(
    jax.jit, static_argnames=("train", "row_tile", "num_parallel", "io_dtype"))
def cwce_loss(output, labels, train=True, *, row_tile=4096, num_parallel=None,
              io_dtype=jnp.bfloat16):
    """Pallas equivalent of CWCELoss.forward.  Returns (fpcls, fpcls)."""
    batch = labels.shape[0]
    # Original module semantics: labels acts as the (B, 1) column broadcast
    # against output[:, :1]; enforce exactly one label per row.
    assert labels.size == batch, "labels must hold exactly one value per row"

    if num_parallel is None:
        num_parallel = _default_num_parallel()
    io_dtype = jnp.dtype(io_dtype)

    # ---- lane-dense repack: one fused XLA copy (we are inside jit) ---------
    # Only logit column 0 leaves HBM; labels ({0,1}) cast losslessly to the
    # narrow io dtype during the copy we already pay for.  bf16 logits trade
    # ~3 decimal digits for half the logit HBM traffic (accumulation is f32);
    # pass io_dtype=jnp.float32 for bit-for-bit-grade numerics.
    x = output[:, 0].reshape(batch).astype(io_dtype)
    lab = labels.reshape(batch).astype(io_dtype)

    rows = _cdiv(batch, _LANES)
    # Keep the double-buffered packed input inside the requested VMEM budget.
    max_row_tile = max(
        _SUBLANES, _INPUT_VMEM_BUDGET // (2 * 2 * _LANES * io_dtype.itemsize))
    row_tile = min(row_tile, max_row_tile, _round_up(rows, _SUBLANES))
    row_tile = max(_SUBLANES, (row_tile // _SUBLANES) * _SUBLANES)

    num_tiles = _cdiv(rows, row_tile)
    n_par = num_parallel if num_tiles >= num_parallel else 1
    tiles_per_core = _cdiv(num_tiles, n_par)
    padded_rows = n_par * tiles_per_core * row_tile
    pad = padded_rows * _LANES - batch

    x_p = jnp.pad(x, (0, pad)).reshape(padded_rows, _LANES)
    lab_p = jnp.pad(lab, (0, pad)).reshape(padded_rows, _LANES)
    packed = jnp.stack([x_p, lab_p])     # (2, padded_rows, 128): one DMA/step

    kernel = functools.partial(_cwce_partial_kernel, batch=batch,
                               row_tile=row_tile, tiles_per_core=tiles_per_core)

    n_elem = padded_rows * _LANES
    cost = pl.CostEstimate(
        flops=10 * n_elem,
        transcendentals=2 * n_elem,
        bytes_accessed=2 * n_elem * io_dtype.itemsize
        + n_par * 3 * _SUBLANES * _LANES * 4,
    )

    parts = pl.pallas_call(
        kernel,
        out_shape=jax.ShapeDtypeStruct((n_par, 3, _SUBLANES, _LANES),
                                       jnp.float32),
        grid_spec=pltpu.PrefetchScalarGridSpec(
            num_scalar_prefetch=0,
            grid=(n_par, tiles_per_core),
            in_specs=[
                pl.BlockSpec((2, row_tile, _LANES),
                             lambda p, t: (0, p * tiles_per_core + t, 0)),
            ],
            out_specs=pl.BlockSpec((1, 3, _SUBLANES, _LANES),
                                   lambda p, t: (p, 0, 0, 0)),
        ),
        compiler_params=pltpu.CompilerParams(
            dimension_semantics=("parallel", "arbitrary"),
            vmem_limit_bytes=_VMEM_LIMIT_BYTES),
        cost_estimate=cost,
    )(packed)

    # Tiny combine: cross-lane reduce of the (n_par, 3, 8, 128) partials.
    partial = jnp.sum(parts, axis=(0, 2, 3))                 # (3,)
    num_pos, pos_sum, neg_sum = partial[0], partial[1], partial[2]
    n = jnp.float32(batch)                                   # labels.numel()
    num_neg = n - num_pos          # sum(labels) + sum(1 - labels) == N exactly
    # fpcls = -Beta_N * pos_loss.mean() - Beta_P * neg_loss.mean(); total == N.
    fpcls = -(num_neg * pos_sum + num_pos * neg_sum) / (n * n)
    # TODO(synk): the PyTorch `if fpcls.item() is np.nan: pdb.set_trace()`
    # host-side debugger hook has no device-side equivalent and is omitted.
    return (fpcls, fpcls)


def _reference(output, labels):
    outs = jax.nn.sigmoid(output[:, :1].astype(jnp.float32))
    labels = labels.astype(jnp.float32)
    neg_labels = 1.0 - labels
    neg_outs = 1.0 - outs
    num_neg = neg_labels.sum()
    num_pos = labels.sum()
    beta_p = num_pos / (num_pos + num_neg)
    beta_n = num_neg / (num_pos + num_neg)
    pos_loss = labels * jnp.log(outs)
    neg_loss = neg_labels * jnp.log(neg_outs)
    return -beta_n * pos_loss.mean() - beta_p * neg_loss.mean()


if __name__ == "__main__":
    key = jax.random.PRNGKey(0)
    k1, k2, k3, k4 = jax.random.split(key, 4)

    # Small shapes consistent with the module: (B, C) logits, (B, 1) labels.
    B, C = 8, 4
    output = jax.random.normal(k1, (B, C), dtype=jnp.float32)
    labels = jax.random.bernoulli(k2, p=0.5, shape=(B, 1)).astype(jnp.float32)
    ref = _reference(output, labels)

    # Exact-precision path (f32 I/O): tight check against the reference.
    fp32, fp32_b = cwce_loss(output, labels, io_dtype=jnp.float32)
    fp32 = jax.block_until_ready(fp32)
    assert jnp.allclose(fp32, ref, rtol=1e-5, atol=1e-6), (fp32, ref)
    assert jnp.allclose(fp32, fp32_b)

    # Default fast path (bf16 I/O, f32 accumulation): loose check.
    fpb, _ = cwce_loss(output, labels)
    fpb = jax.block_until_ready(fpb)
    assert jnp.allclose(fpb, ref, rtol=5e-2, atol=5e-3), (fpb, ref)

    # Multi-tile path: forces several grid steps, the masked tail tile, and
    # (on 2-TC chips) the parallel split + all-padding tile.
    B2, C2 = 2500, 4
    output2 = jax.random.normal(k3, (B2, C2), dtype=jnp.float32)
    labels2 = jax.random.bernoulli(k4, p=0.3, shape=(B2, 1)).astype(jnp.float32)
    fp2, _ = cwce_loss(output2, labels2, io_dtype=jnp.float32, row_tile=8)
    fp2 = jax.block_until_ready(fp2)
    ref2 = _reference(output2, labels2)
    assert jnp.allclose(fp2, ref2, rtol=1e-5, atol=1e-6), (fp2, ref2)

    print("KERNEL_OK")
</pallas_src>

<mosaic_0001>
module attributes {stable_mosaic.version = 11 : i64} {
  func.func @_cwce_partial_kernel(%arg0: i32, %arg1: i32, %arg2: memref<2x8x128xf32, #tpu.memory_space<vmem>>, %arg3: memref<1x3x8x128xf32, #tpu.memory_space<vmem>>) attributes {dimension_semantics = [#tpu.dimension_semantics<parallel>, #tpu.dimension_semantics<arbitrary>], iteration_bounds = array<i64: 1, 1>, scalar_prefetch = 0 : i64, scratch_operands = 0 : i64, tpu.core_type = #tpu.core_type<tc>, window_params = [{transform_indices = @transform_0, window_bounds = array<i64: 2, 8, 128>}, {transform_indices = @transform_1, window_bounds = array<i64: 1, 3, 8, 128>}]} {
    %c0_i32 = arith.constant 0 : i32
    %0 = arith.cmpi eq, %arg1, %c0_i32 : i32
    %1 = arith.extui %0 : i1 to i32
    %c0_i32_0 = arith.constant 0 : i32
    %2 = arith.cmpi ne, %1, %c0_i32_0 : i32
    scf.if %2 {
      %cst_14 = arith.constant 0.000000e+00 : f32
      %33 = vector.broadcast %cst_14 : f32 to vector<1x3x8x128xf32>
      %c0_15 = arith.constant 0 : index
      %c0_16 = arith.constant 0 : index
      %c0_17 = arith.constant 0 : index
      %c0_18 = arith.constant 0 : index
      %34 = vector.load %arg3[%c0_15, %c0_16, %c0_17, %c0_18] : memref<1x3x8x128xf32, #tpu.memory_space<vmem>>, vector<1x3x8x128xf32>
      tpu.vector_store %arg3[%c0_15, %c0_16, %c0_17, %c0_18], %33 {strides = array<i32>} : memref<1x3x8x128xf32, #tpu.memory_space<vmem>>, vector<1x3x8x128xf32>,
    } else {
    }
    %c0 = arith.constant 0 : index
    %c0_1 = arith.constant 0 : index
    %c0_2 = arith.constant 0 : index
    %3 = vector.load %arg2[%c0, %c0_1, %c0_2] : memref<2x8x128xf32, #tpu.memory_space<vmem>>, vector<1x8x128xf32>
    %4 = vector.shape_cast %3 : vector<1x8x128xf32> to vector<8x128xf32>
    %c1 = arith.constant 1 : index
    %c0_3 = arith.constant 0 : index
    %c0_4 = arith.constant 0 : index
    %5 = vector.load %arg2[%c1, %c0_3, %c0_4] : memref<2x8x128xf32, #tpu.memory_space<vmem>>, vector<1x8x128xf32>
    %6 = vector.shape_cast %5 : vector<1x8x128xf32> to vector<8x128xf32>
    %7 = math.absf %4 : vector<8x128xf32>
    %cst = arith.constant 0.000000e+00 : f32
    %8 = vector.broadcast %cst : f32 to vector<8x128xf32>
    %9 = arith.subf %8, %7 : vector<8x128xf32>
    %10 = math.exp %9 : vector<8x128xf32>
    %cst_5 = arith.constant 1.000000e+00 : f32
    %11 = vector.broadcast %cst_5 : f32 to vector<8x128xf32>
    %12 = arith.addf %11, %10 : vector<8x128xf32>
    %13 = math.log %12 : vector<8x128xf32>
    %cst_6 = arith.constant 0.000000e+00 : f32
    %14 = vector.broadcast %cst_6 : f32 to vector<8x128xf32>
    %15 = arith.minimumf %4, %14 : vector<8x128xf32>
    %16 = arith.subf %15, %13 : vector<8x128xf32>
    %cst_7 = arith.constant 0.000000e+00 : f32
    %17 = vector.broadcast %cst_7 : f32 to vector<8x128xf32>
    %18 = arith.subf %17, %4 : vector<8x128xf32>
    %cst_8 = arith.constant 0.000000e+00 : f32
    %19 = vector.broadcast %cst_8 : f32 to vector<8x128xf32>
    %20 = arith.minimumf %18, %19 : vector<8x128xf32>
    %21 = arith.subf %20, %13 : vector<8x128xf32>
    %c1_i32 = arith.constant 1 : i32
    %22 = arith.muli %arg0, %c1_i32 : i32
    %23 = arith.addi %22, %arg1 : i32
    %c1024_i32 = arith.constant 1024 : i32
    %24 = arith.muli %23, %c1024_i32 : i32
    %c1024_i32_9 = arith.constant 1024 : i32
    %25 = arith.addi %24, %c1024_i32_9 : i32
    %c8_i32 = arith.constant 8 : i32
    %26 = arith.cmpi sle, %25, %c8_i32 : i32
    %27 = arith.extui %26 : i1 to i32
    %c0_i32_10 = arith.constant 0 : i32
    %28 = arith.cmpi ne, %27, %c0_i32_10 : i32
    scf.if %28 {
      %cst_14 = arith.constant 1.000000e+00 : f32
      %33 = vector.broadcast %cst_14 : f32 to vector<8x128xf32>
      %34 = arith.subf %33, %6 : vector<8x128xf32>
      %c0_15 = arith.constant 0 : index
      %c0_16 = arith.constant 0 : index
      %c0_17 = arith.constant 0 : index
      %c0_18 = arith.constant 0 : index
      %35 = vector.load %arg3[%c0_15, %c0_16, %c0_17, %c0_18] : memref<1x3x8x128xf32, #tpu.memory_space<vmem>>, vector<1x1x8x128xf32>
      %36 = vector.shape_cast %35 : vector<1x1x8x128xf32> to vector<8x128xf32>
      %37 = vector.shape_cast %6 : vector<8x128xf32> to vector<1x8x128xf32>
      %cst_19 = arith.constant dense<0.000000e+00> : vector<8x128xf32>
      %38 = vector.multi_reduction <add>, %37, %cst_19 [0] : vector<1x8x128xf32> to vector<8x128xf32>
      %39 = arith.addf %36, %38 : vector<8x128xf32>
      %c0_20 = arith.constant 0 : index
      %c0_21 = arith.constant 0 : index
      %c0_22 = arith.constant 0 : index
      %c0_23 = arith.constant 0 : index
      %40 = vector.load %arg3[%c0_20, %c0_21, %c0_22, %c0_23] : memref<1x3x8x128xf32, #tpu.memory_space<vmem>>, vector<1x1x8x128xf32>
      %41 = vector.shape_cast %40 : vector<1x1x8x128xf32> to vector<8x128xf32>
      %42 = vector.shape_cast %39 : vector<8x128xf32> to vector<1x1x8x128xf32>
      tpu.vector_store %arg3[%c0_20, %c0_21, %c0_22, %c0_23], %42 {strides = array<i32>} : memref<1x3x8x128xf32, #tpu.memory_space<vmem>>, vector<1x1x8x128xf32>,
      %c0_24 = arith.constant 0 : index
      %c1_25 = arith.constant 1 : index
      %c0_26 = arith.constant 0 : index
      %c0_27 = arith.constant 0 : index
      %43 = vector.load %arg3[%c0_24, %c1_25, %c0_26, %c0_27] : memref<1x3x8x128xf32, #tpu.memory_space<vmem>>, vector<1x1x8x128xf32>
      %44 = vector.shape_cast %43 : vector<1x1x8x128xf32> to vector<8x128xf32>
      %45 = arith.mulf %6, %16 : vector<8x128xf32>
      %46 = vector.shape_cast %45 : vector<8x128xf32> to vector<1x8x128xf32>
      %cst_28 = arith.constant dense<0.000000e+00> : vector<8x128xf32>
      %47 = vector.multi_reduction <add>, %46, %cst_28 [0] : vector<1x8x128xf32> to vector<8x128xf32>
      %48 = arith.addf %44, %47 : vector<8x128xf32>
      %c0_29 = arith.constant 0 : index
      %c1_30 = arith.constant 1 : index
      %c0_31 = arith.constant 0 : index
      %c0_32 = arith.constant 0 : index
      %49 = vector.load %arg3[%c0_29, %c1_30, %c0_31, %c0_32] : memref<1x3x8x128xf32, #tpu.memory_space<vmem>>, vector<1x1x8x128xf32>
      %50 = vector.shape_cast %49 : vector<1x1x8x128xf32> to vector<8x128xf32>
      %51 = vector.shape_cast %48 : vector<8x128xf32> to vector<1x1x8x128xf32>
      tpu.vector_store %arg3[%c0_29, %c1_30, %c0_31, %c0_32], %51 {strides = array<i32>} : memref<1x3x8x128xf32, #tpu.memory_space<vmem>>, vector<1x1x8x128xf32>,
      %c0_33 = arith.constant 0 : index
      %c2 = arith.constant 2 : index
      %c0_34 = arith.constant 0 : index
      %c0_35 = arith.constant 0 : index
      %52 = vector.load %arg3[%c0_33, %c2, %c0_34, %c0_35] : memref<1x3x8x128xf32, #tpu.memory_space<vmem>>, vector<1x1x8x128xf32>
      %53 = vector.shape_cast %52 : vector<1x1x8x128xf32> to vector<8x128xf32>
      %54 = arith.mulf %34, %21 : vector<8x128xf32>
      %55 = vector.shape_cast %54 : vector<8x128xf32> to vector<1x8x128xf32>
      %cst_36 = arith.constant dense<0.000000e+00> : vector<8x128xf32>
      %56 = vector.multi_reduction <add>, %55, %cst_36 [0] : vector<1x8x128xf32> to vector<8x128xf32>
      %57 = arith.addf %53, %56 : vector<8x128xf32>
      %c0_37 = arith.constant 0 : index
      %c2_38 = arith.constant 2 : index
      %c0_39 = arith.constant 0 : index
      %c0_40 = arith.constant 0 : index
      %58 = vector.load %arg3[%c0_37, %c2_38, %c0_39, %c0_40] : memref<1x3x8x128xf32, #tpu.memory_space<vmem>>, vector<1x1x8x128xf32>
      %59 = vector.shape_cast %58 : vector<1x1x8x128xf32> to vector<8x128xf32>
      %60 = vector.shape_cast %57 : vector<8x128xf32> to vector<1x1x8x128xf32>
      tpu.vector_store %arg3[%c0_37, %c2_38, %c0_39, %c0_40], %60 {strides = array<i32>} : memref<1x3x8x128xf32, #tpu.memory_space<vmem>>, vector<1x1x8x128xf32>,
    } else {
    }
    %c1024_i32_11 = arith.constant 1024 : i32
    %29 = arith.addi %24, %c1024_i32_11 : i32
    %c8_i32_12 = arith.constant 8 : i32
    %30 = arith.cmpi sgt, %29, %c8_i32_12 : i32
    %31 = arith.extui %30 : i1 to i32
    %c0_i32_13 = arith.constant 0 : i32
    %32 = arith.cmpi ne, %31, %c0_i32_13 : i32
    scf.if %32 {
      %33 = tpu.iota {dimensions = array<i32: 0>} : vector<8x128xi32>
      %34 = tpu.iota {dimensions = array<i32: 1>} : vector<8x128xi32>
      %c128_i32 = arith.constant 128 : i32
      %35 = vector.broadcast %c128_i32 : i32 to vector<8x128xi32>
      %36 = arith.muli %33, %35 : vector<8x128xi32>
      %37 = vector.broadcast %24 : i32 to vector<8x128xi32>
      %38 = arith.addi %37, %36 : vector<8x128xi32>
      %39 = arith.addi %38, %34 : vector<8x128xi32>
      %c8_i32_14 = arith.constant 8 : i32
      %40 = vector.broadcast %c8_i32_14 : i32 to vector<8x128xi32>
      %41 = arith.cmpi slt, %39, %40 : vector<8x128xi32>
      %42 = arith.extui %41 : vector<8x128xi1> to vector<8x128xi32>
      %43 = arith.sitofp %42 : vector<8x128xi32> to vector<8x128xf32>
      %44 = arith.mulf %6, %43 : vector<8x128xf32>
      %cst_15 = arith.constant 1.000000e+00 : f32
      %45 = vector.broadcast %cst_15 : f32 to vector<8x128xf32>
      %46 = arith.subf %45, %6 : vector<8x128xf32>
      %47 = arith.mulf %46, %43 : vector<8x128xf32>
      %c0_16 = arith.constant 0 : index
      %c0_17 = arith.constant 0 : index
      %c0_18 = arith.constant 0 : index
      %c0_19 = arith.constant 0 : index
      %48 = vector.load %arg3[%c0_16, %c0_17, %c0_18, %c0_19] : memref<1x3x8x128xf32, #tpu.memory_space<vmem>>, vector<1x1x8x128xf32>
      %49 = vector.shape_cast %48 : vector<1x1x8x128xf32> to vector<8x128xf32>
      %50 = vector.shape_cast %44 : vector<8x128xf32> to vector<1x8x128xf32>
      %cst_20 = arith.constant dense<0.000000e+00> : vector<8x128xf32>
      %51 = vector.multi_reduction <add>, %50, %cst_20 [0] : vector<1x8x128xf32> to vector<8x128xf32>
      %52 = arith.addf %49, %51 : vector<8x128xf32>
      %c0_21 = arith.constant 0 : index
      %c0_22 = arith.constant 0 : index
      %c0_23 = arith.constant 0 : index
      %c0_24 = arith.constant 0 : index
      %53 = vector.load %arg3[%c0_21, %c0_22, %c0_23, %c0_24] : memref<1x3x8x128xf32, #tpu.memory_space<vmem>>, vector<1x1x8x128xf32>
      %54 = vector.shape_cast %53 : vector<1x1x8x128xf32> to vector<8x128xf32>
      %55 = vector.shape_cast %52 : vector<8x128xf32> to vector<1x1x8x128xf32>
      tpu.vector_store %arg3[%c0_21, %c0_22, %c0_23, %c0_24], %55 {strides = array<i32>} : memref<1x3x8x128xf32, #tpu.memory_space<vmem>>, vector<1x1x8x128xf32>,
      %c0_25 = arith.constant 0 : index
      %c1_26 = arith.constant 1 : index
      %c0_27 = arith.constant 0 : index
      %c0_28 = arith.constant 0 : index
      %56 = vector.load %arg3[%c0_25, %c1_26, %c0_27, %c0_28] : memref<1x3x8x128xf32, #tpu.memory_space<vmem>>, vector<1x1x8x128xf32>
      %57 = vector.shape_cast %56 : vector<1x1x8x128xf32> to vector<8x128xf32>
      %58 = arith.mulf %44, %16 : vector<8x128xf32>
      %59 = vector.shape_cast %58 : vector<8x128xf32> to vector<1x8x128xf32>
      %cst_29 = arith.constant dense<0.000000e+00> : vector<8x128xf32>
      %60 = vector.multi_reduction <add>, %59, %cst_29 [0] : vector<1x8x128xf32> to vector<8x128xf32>
      %61 = arith.addf %57, %60 : vector<8x128xf32>
      %c0_30 = arith.constant 0 : index
      %c1_31 = arith.constant 1 : index
      %c0_32 = arith.constant 0 : index
      %c0_33 = arith.constant 0 : index
      %62 = vector.load %arg3[%c0_30, %c1_31, %c0_32, %c0_33] : memref<1x3x8x128xf32, #tpu.memory_space<vmem>>, vector<1x1x8x128xf32>
      %63 = vector.shape_cast %62 : vector<1x1x8x128xf32> to vector<8x128xf32>
      %64 = vector.shape_cast %61 : vector<8x128xf32> to vector<1x1x8x128xf32>
      tpu.vector_store %arg3[%c0_30, %c1_31, %c0_32, %c0_33], %64 {strides = array<i32>} : memref<1x3x8x128xf32, #tpu.memory_space<vmem>>, vector<1x1x8x128xf32>,
      %c0_34 = arith.constant 0 : index
      %c2 = arith.constant 2 : index
      %c0_35 = arith.constant 0 : index
      %c0_36 = arith.constant 0 : index
      %65 = vector.load %arg3[%c0_34, %c2, %c0_35, %c0_36] : memref<1x3x8x128xf32, #tpu.memory_space<vmem>>, vector<1x1x8x128xf32>
      %66 = vector.shape_cast %65 : vector<1x1x8x128xf32> to vector<8x128xf32>
      %67 = arith.mulf %47, %21 : vector<8x128xf32>
      %68 = vector.shape_cast %67 : vector<8x128xf32> to vector<1x8x128xf32>
      %cst_37 = arith.constant dense<0.000000e+00> : vector<8x128xf32>
      %69 = vector.multi_reduction <add>, %68, %cst_37 [0] : vector<1x8x128xf32> to vector<8x128xf32>
      %70 = arith.addf %66, %69 : vector<8x128xf32>
      %c0_38 = arith.constant 0 : index
      %c2_39 = arith.constant 2 : index
      %c0_40 = arith.constant 0 : index
      %c0_41 = arith.constant 0 : index
      %71 = vector.load %arg3[%c0_38, %c2_39, %c0_40, %c0_41] : memref<1x3x8x128xf32, #tpu.memory_space<vmem>>, vector<1x1x8x128xf32>
      %72 = vector.shape_cast %71 : vector<1x1x8x128xf32> to vector<8x128xf32>
      %73 = vector.shape_cast %70 : vector<8x128xf32> to vector<1x1x8x128xf32>
      tpu.vector_store %arg3[%c0_38, %c2_39, %c0_40, %c0_41], %73 {strides = array<i32>} : memref<1x3x8x128xf32, #tpu.memory_space<vmem>>, vector<1x1x8x128xf32>,
    } else {
    }
    return
  }
  func.func @transform_0(%arg0: i32, %arg1: i32) -> (i32, i32, i32) {
    %c1_i32 = arith.constant 1 : i32
    %0 = arith.muli %arg0, %c1_i32 : i32
    %1 = arith.addi %0, %arg1 : i32
    %c0_i32 = arith.constant 0 : i32
    %c0_i32_0 = arith.constant 0 : i32
    %c0_i32_1 = arith.constant 0 : i32
    return %c0_i32, %1, %c0_i32_0 : i32, i32, i32
  }
  func.func @transform_1(%arg0: i32, %arg1: i32) -> (i32, i32, i32, i32) {
    %c0_i32 = arith.constant 0 : i32
    %c0_i32_0 = arith.constant 0 : i32
    %c0_i32_1 = arith.constant 0 : i32
    %c0_i32_2 = arith.constant 0 : i32
    return %arg0, %c0_i32, %c0_i32_0, %c0_i32_1 : i32, i32, i32, i32
  }
}

</mosaic_0001>

<llo_original>
// kernel: cwce_loss.1
$region0: #{cwce_loss.1}
  #allocation0 [shape = 'u32[]', space=smem, size = 0x4, offset = 0x4, fixed_abs, tag = 'smem constant byte address 0x4 - core index']
  #allocation1 [shape = 'u32[144,128]{1,0:T(1,128)}', space=vmem, size = 0x12000, scoped, tag = 'internal scratch']
  %s0 = inlined_call_operand.vmem [shape: f32[2,8,128], index: 0, kind: input, shape index: {}]
  %s1 = inlined_call_operand.vmem [shape: f32[1,3,8,128], index: 1, kind: output, shape index: {}]
  %s2 = sld [smem:[#allocation0]]
  $region26: #{cwce_loss.1} parent=0
    _
  %s4 = ssub.s32 1, %s2
  %s5 = scalar_select 0, %s4, %s2
  // Predicated region
  $region2: #{cwce_loss.1} parent=0 // pred_check
    _
  $region3: #{cwce_loss.1} parent=0 // pred_check_branch
    %7 = sbr.rel (0) target = $region5
  $region4: #{cwce_loss.1} parent=0 // pred_region
    %s8 = sadd.s32 0, 0
    %p9 = scmp.lt.s32.totalorder %s8, 0
    %s10 = scalar_select %p9, %s8, 0
    %s11 = smul.addr %s10, 8
    %s12 = scalar_lea.vmem %s0, %s11
    %s13 = sadd.s32 0, 0
  $region5: #{cwce_loss.1} parent=0 // pred_fallthru
    _
  %s14 = sadd.s32 0, 0
  %p15 = scmp.lt.s32.totalorder %s14, 0
  %s16 = scalar_select %p15, %s14, 0
  %s17 = smul.addr %s16, 8
  %s18 = scalar_lea.vmem %s0, %s17
  %s19 = sadd.s32 0, 0
  %p20 = scmp.lt.s32.totalorder %s19, 0
  %s21 = scalar_select %p20, %s19, 0
  %s22 = smul.addr %s21, 8
  %s23 = scalar_lea.vmem %s0, %s22
  %s24 = sadd.s32 0, 0
  %p25 = scmp.eq.s32.totalorder 0, 0
  // Predicated region
  $region6: #{cwce_loss.1} parent=0 // pred_check
    %p26 = pneg %p25
  $region7: #{cwce_loss.1} parent=0 // pred_check_branch
    %28 = sbr.rel (%p26) target = $region9
  $region8: #{cwce_loss.1} parent=0 // pred_region
    %29 = vst [vmem:[%s1] sm:$0xff] 0.0
    %30 = vst [vmem:[%s1 + $0x8] sm:$0xff] 0.0
    %31 = vst [vmem:[%s1 + $0x10] sm:$0xff] 0.0
  $region9: #{cwce_loss.1} parent=0 // pred_fallthru
    _
  %v32 = vld [vmem:[%s23] sm:$0xff]
  %s33 = scalar_lea.vmem %s23, 8
  %v34 = vld [vmem:[%s33] sm:$0xff]
  %v35 = vand.u32 2147483647, %v32
  %v36 = vsub.f32 0.0, %v35
  %v37 = vmul.f32 %v36, 1.442695
  %v38 = vpow.pop %v37
  %v39 = vadd.f32 %v38, 1.0
  %v40 = vlog2.pop %v39
  %v41 = vmul.f32 %v40, 0.6931472
  %v42 = vmin.f32 %v32, 0.0
  %v43 = vsub.f32 %v42, %v41
  %v44 = vsub.f32 0.0, %v32
  %v45 = vmin.f32 %v44, 0.0
  %v46 = vsub.f32 %v45, %v41
  %s47 = sadd.s32 0, 0
  %s48 = smul.u32 %s47, 1024
  %s49 = sadd.s32 %s48, 1024
  %p50 = scmp.le.s32.totalorder %s49, 8
  // Predicated region
  $region10: #{cwce_loss.1} parent=0 // pred_check
    %p51 = pneg %p50
  $region11: #{cwce_loss.1} parent=0 // pred_check_branch
    %53 = sbr.rel (%p51) target = $region13
  $region12: #{cwce_loss.1} parent=0 // pred_region
    %v54 = vsub.f32 1.0, %v34
    %v55 = vld [vmem:[%s1] sm:$0xff]
    %v56 = vadd.f32 %v34, 0.0
    %v57 = vadd.f32 %v55, %v56
    %58 = vst [vmem:[%s1] sm:$0xff] %v57
    %s59 = scalar_lea.vmem %s1, 8
    %v60 = vld [vmem:[%s59] sm:$0xff]
    %v61 = vmul.f32 %v34, %v43
    %v62 = vadd.f32 %v61, 0.0
    %v63 = vadd.f32 %v60, %v62
    %64 = vst [vmem:[%s59] sm:$0xff] %v63
    %s65 = scalar_lea.vmem %s1, 16
    %v66 = vld [vmem:[%s65] sm:$0xff]
    %v67 = vmul.f32 %v54, %v46
    %v68 = vadd.f32 %v67, 0.0
    %v69 = vadd.f32 %v66, %v68
    %70 = vst [vmem:[%s65] sm:$0xff] %v69
  $region13: #{cwce_loss.1} parent=0 // pred_fallthru
    _
  %p71 = scmp.gt.s32.totalorder %s49, 8
  // Predicated region
  $region14: #{cwce_loss.1} parent=0 // pred_check
    %p72 = pneg %p71
  $region15: #{cwce_loss.1} parent=0 // pred_check_branch
    %74 = sbr.rel (%p72) target = $region17
  $region16: #{cwce_loss.1} parent=0 // pred_region
    %v75 = vlaneseq
    %v76 = vshrl.u32 %v75, 7
    %v77 = vlaneseq
    %v78 = vand.u32 %v77, 127
    %v79 = vmul.u32 %v76, 128
    %v80 = vstv %s48
    %v81 = vadd.s32 %v80, %v79
    %v82 = vadd.s32 %v81, %v78
    %vm83 = vcmp.lt.s32.totalorder %v82, 8
    %v84 = vsel %vm83, 1, 0
    %v85 = vcvt.s32.f32 %v84
    %v86 = vmul.f32 %v34, %v85
    %v87 = vsub.f32 1.0, %v34
    %v88 = vmul.f32 %v87, %v85
    %v89 = vld [vmem:[%s1] sm:$0xff]
    %v90 = vadd.f32 %v86, 0.0
    %v91 = vadd.f32 %v89, %v90
    %92 = vst [vmem:[%s1] sm:$0xff] %v91
    %s93 = scalar_lea.vmem %s1, 8
    %v94 = vld [vmem:[%s93] sm:$0xff]
    %v95 = vmul.f32 %v86, %v43
    %v96 = vadd.f32 %v95, 0.0
    %v97 = vadd.f32 %v94, %v96
    %98 = vst [vmem:[%s93] sm:$0xff] %v97
    %s99 = scalar_lea.vmem %s1, 16
    %v100 = vld [vmem:[%s99] sm:$0xff]
    %v101 = vmul.f32 %v88, %v46
    %v102 = vadd.f32 %v101, 0.0
    %v103 = vadd.f32 %v100, %v102
    %104 = vst [vmem:[%s99] sm:$0xff] %v103
  $region17: #{cwce_loss.1} parent=0 // pred_fallthru
    _
  // Predicated region
  $region18: #{cwce_loss.1} parent=0 // pred_check
    _
  $region19: #{cwce_loss.1} parent=0 // pred_check_branch
    %106 = sbr.rel (0) target = $region21
  $region20: #{cwce_loss.1} parent=0 // pred_region
    _
  $region21: #{cwce_loss.1} parent=0 // pred_fallthru
    _
  // Predicated region
  $region22: #{cwce_loss.1} parent=0 // pred_check
    _
  $region23: #{cwce_loss.1} parent=0 // pred_check_branch
    %108 = sbr.rel (0) target = $region25
  $region24: #{cwce_loss.1} parent=0 // pred_region
    _
  $region25: #{cwce_loss.1} parent=0 // pred_fallthru
    _

</llo_original>
